<compile_context>
chip_gen: v6e
topology: v6e:2x2x1
jax: 0.10.0
libtpu: 0.0.40
codegen_flags: <defaults>
</compile_context>

<pallas_src>
from functools import partial

import jax
import jax.numpy as jnp
from jax.experimental import pallas as pl
from jax.experimental.pallas import tpu as pltpu


def _prev_cmd_emb_kernel(idx_ref, emb_ref, out_ref, *, num_ctype, num_prev):
    """out[n, :] = sum_c emb[idx[n, c], :]  via one-hot counts + one MXU matmul."""
    idx = idx_ref[...]                                           # (TN, C) int32
    tn = idx.shape[0]

    iota_k = jax.lax.broadcasted_iota(jnp.int32, (tn, num_ctype), 1)
    counts = jnp.zeros((tn, num_ctype), jnp.float32)
    # num_prev is small & static -> unrolled 2-D one-hot accumulation on the VPU.
    for c in range(num_prev):
        col = idx[:, c:c + 1]                                    # (TN, 1)
        counts = counts + jnp.where(iota_k == col, 1.0, 0.0)

    out = jnp.dot(counts, emb_ref[...], preferred_element_type=jnp.float32)
    out_ref[...] = out.astype(out_ref.dtype)


def prev_cmd_embedding(prev_cmd, num_cmd, emb_table, *, block_rows=512):
    """PrevCmdEmbedding.forward as one fused Pallas kernel.

    prev_cmd : (B, U, C) int  -- 0 <= ctype < num_ctype, 0 is padding
    num_cmd  : (B, U)    int  -- unused by the forward (API parity with PyTorch)
    emb_table: (num_ctype, emb_dim) f32, row 0 is all-zero (padding_idx=0)
    returns  : (B, U, emb_dim)
    """
    del num_cmd  # not used by the reference forward
    B, U, C = prev_cmd.shape
    K, D = emb_table.shape
    N = B * U
    idx = prev_cmd.reshape(N, C).astype(jnp.int32)

    # Pick a row tile: whole thing if small, otherwise block_rows; pad the
    # fused row dim to a sublane multiple so BlockSpec (8,*) rules hold.
    if N <= block_rows:
        tn = max(8, ((N + 7) // 8) * 8)
    else:
        tn = block_rows
    n_pad = pl.cdiv(N, tn) * tn
    if n_pad != N:
        # Padding rows use ctype 0 -> embedding row 0 is zero, so they are inert.
        idx = jnp.concatenate(
            [idx, jnp.zeros((n_pad - N, C), jnp.int32)], axis=0)

    out = pl.pallas_call(
        partial(_prev_cmd_emb_kernel, num_ctype=K, num_prev=C),
        out_shape=jax.ShapeDtypeStruct((n_pad, D), emb_table.dtype),
        grid=(n_pad // tn,),
        in_specs=[
            pl.BlockSpec((tn, C), lambda i: (i, 0)),       # row tile of indices
            pl.BlockSpec((K, D), lambda i: (0, 0)),        # table resident in VMEM
        ],
        out_specs=pl.BlockSpec((tn, D), lambda i: (i, 0)),
        compiler_params=pltpu.CompilerParams(
            dimension_semantics=("parallel",)),            # shards rows on v7x 2-TC
    )(idx, emb_table)

    return out[:N].reshape(B, U, D)


class PrevCmdEmbeddingPallas:
    """JAX/Pallas port of PrevCmdEmbedding."""

    def __init__(self, num_ctype, emb_dim, key):
        self.num_ctype = num_ctype
        self.emb_dim = emb_dim
        self.out_dim = emb_dim
        # nn.Embedding default init ~ N(0,1); padding_idx=0 zeroes row 0.
        table = jax.random.normal(key, (num_ctype, emb_dim), jnp.float32)
        self.emb_table = table.at[0].set(0.0)

    def __call__(self, prev_cmd, num_cmd):
        return prev_cmd_embedding(prev_cmd, num_cmd, self.emb_table)


def _reference_forward(prev_cmd, emb_table):
    """Pure-JAX reference matching PyTorch: gather embeddings, sum over dim 2."""
    return emb_table[prev_cmd].sum(axis=2)


if __name__ == "__main__":
    key = jax.random.PRNGKey(0)
    k_tab, k_idx, k_num = jax.random.split(key, 3)

    batch, num_unit, num_prev = 2, 8, 4
    num_ctype, emb_dim = 32, 64

    mod = PrevCmdEmbeddingPallas(num_ctype, emb_dim, k_tab)

    prev_cmd = jax.random.randint(
        k_idx, (batch, num_unit, num_prev), 0, num_ctype, dtype=jnp.int32)
    # Sprinkle explicit padding (ctype 0) commands, like real padded inputs.
    prev_cmd = prev_cmd.at[:, :, -1].set(0)
    num_cmd = jax.random.randint(
        k_num, (batch, num_unit), 0, num_prev, dtype=jnp.int32)

    y = mod(prev_cmd, num_cmd)
    y = jax.block_until_ready(y)

    y_ref = _reference_forward(prev_cmd, mod.emb_table)
    assert y.shape == (batch, num_unit, emb_dim), y.shape
    assert jnp.allclose(y, y_ref, atol=1e-5, rtol=1e-5), float(
        jnp.max(jnp.abs(y - y_ref)))

    print("KERNEL_OK")
</pallas_src>

<mosaic_0001>
module attributes {stable_mosaic.version = 11 : i64} {
  func.func @_prev_cmd_emb_kernel(%arg0: i32, %arg1: memref<16x4xi32, #tpu.memory_space<vmem>>, %arg2: memref<32x64xf32, #tpu.memory_space<vmem>>, %arg3: memref<16x64xf32, #tpu.memory_space<vmem>>) attributes {dimension_semantics = [#tpu.dimension_semantics<parallel>], iteration_bounds = array<i64: 1>, scalar_prefetch = 0 : i64, scratch_operands = 0 : i64, tpu.core_type = #tpu.core_type<tc>, window_params = [{transform_indices = @transform_0, window_bounds = array<i64: 16, 4>}, {pipeline_mode = #tpu.pipeline_mode<synchronous>, transform_indices = @transform_1, window_bounds = array<i64: 32, 64>}, {transform_indices = @transform_2, window_bounds = array<i64: 16, 64>}]} {
    %c0 = arith.constant 0 : index
    %c0_0 = arith.constant 0 : index
    %0 = vector.load %arg1[%c0, %c0_0] : memref<16x4xi32, #tpu.memory_space<vmem>>, vector<16x4xi32>
    %1 = tpu.iota {dimensions = array<i32: 1>} : vector<16x32xi32>
    %cst = arith.constant 0.000000e+00 : f32
    %2 = vector.broadcast %cst : f32 to vector<16x32xf32>
    %3 = vector.extract_strided_slice %0 {offsets = [0, 0], sizes = [16, 1], strides = [1, 1]} : vector<16x4xi32> to vector<16x1xi32>
    %4 = vector.broadcast %3 : vector<16x1xi32> to vector<16x32xi32>
    %5 = arith.cmpi eq, %1, %4 : vector<16x32xi32>
    %cst_1 = arith.constant 1.000000e+00 : f32
    %cst_2 = arith.constant 0.000000e+00 : f32
    %6 = vector.broadcast %cst_1 : f32 to vector<16x32xf32>
    %7 = vector.broadcast %cst_2 : f32 to vector<16x32xf32>
    %8 = arith.select %5, %6, %7 : vector<16x32xi1>, vector<16x32xf32>
    %9 = arith.addf %2, %8 : vector<16x32xf32>
    %10 = vector.extract_strided_slice %0 {offsets = [0, 1], sizes = [16, 1], strides = [1, 1]} : vector<16x4xi32> to vector<16x1xi32>
    %11 = vector.broadcast %10 : vector<16x1xi32> to vector<16x32xi32>
    %12 = arith.cmpi eq, %1, %11 : vector<16x32xi32>
    %cst_3 = arith.constant 1.000000e+00 : f32
    %cst_4 = arith.constant 0.000000e+00 : f32
    %13 = vector.broadcast %cst_3 : f32 to vector<16x32xf32>
    %14 = vector.broadcast %cst_4 : f32 to vector<16x32xf32>
    %15 = arith.select %12, %13, %14 : vector<16x32xi1>, vector<16x32xf32>
    %16 = arith.addf %9, %15 : vector<16x32xf32>
    %17 = vector.extract_strided_slice %0 {offsets = [0, 2], sizes = [16, 1], strides = [1, 1]} : vector<16x4xi32> to vector<16x1xi32>
    %18 = vector.broadcast %17 : vector<16x1xi32> to vector<16x32xi32>
    %19 = arith.cmpi eq, %1, %18 : vector<16x32xi32>
    %cst_5 = arith.constant 1.000000e+00 : f32
    %cst_6 = arith.constant 0.000000e+00 : f32
    %20 = vector.broadcast %cst_5 : f32 to vector<16x32xf32>
    %21 = vector.broadcast %cst_6 : f32 to vector<16x32xf32>
    %22 = arith.select %19, %20, %21 : vector<16x32xi1>, vector<16x32xf32>
    %23 = arith.addf %16, %22 : vector<16x32xf32>
    %24 = vector.extract_strided_slice %0 {offsets = [0, 3], sizes = [16, 1], strides = [1, 1]} : vector<16x4xi32> to vector<16x1xi32>
    %25 = vector.broadcast %24 : vector<16x1xi32> to vector<16x32xi32>
    %26 = arith.cmpi eq, %1, %25 : vector<16x32xi32>
    %cst_7 = arith.constant 1.000000e+00 : f32
    %cst_8 = arith.constant 0.000000e+00 : f32
    %27 = vector.broadcast %cst_7 : f32 to vector<16x32xf32>
    %28 = vector.broadcast %cst_8 : f32 to vector<16x32xf32>
    %29 = arith.select %26, %27, %28 : vector<16x32xi1>, vector<16x32xf32>
    %30 = arith.addf %23, %29 : vector<16x32xf32>
    %c0_9 = arith.constant 0 : index
    %c0_10 = arith.constant 0 : index
    %31 = vector.load %arg2[%c0_9, %c0_10] : memref<32x64xf32, #tpu.memory_space<vmem>>, vector<32x64xf32>
    %cst_11 = arith.constant dense<0.000000e+00> : vector<16x64xf32>
    %32 = tpu.matmul %30, %31, %cst_11 {dimension_numbers = #tpu.dot_dimension_numbers<[1], [0], [0], [1], [0, 0, 1, 1], [], []>} : vector<16x32xf32>, vector<32x64xf32>, vector<16x64xf32> -> vector<16x64xf32>
    %c0_12 = arith.constant 0 : index
    %c0_13 = arith.constant 0 : index
    %33 = vector.load %arg3[%c0_12, %c0_13] : memref<16x64xf32, #tpu.memory_space<vmem>>, vector<16x64xf32>
    tpu.vector_store %arg3[%c0_12, %c0_13], %32 {strides = array<i32>} : memref<16x64xf32, #tpu.memory_space<vmem>>, vector<16x64xf32>,
    return
  }
  func.func @transform_0(%arg0: i32) -> (i32, i32) {
    %c0_i32 = arith.constant 0 : i32
    %c0_i32_0 = arith.constant 0 : i32
    return %arg0, %c0_i32 : i32, i32
  }
  func.func @transform_1(%arg0: i32) -> (i32, i32) {
    %c0_i32 = arith.constant 0 : i32
    %c0_i32_0 = arith.constant 0 : i32
    %c0_i32_1 = arith.constant 0 : i32
    return %c0_i32, %c0_i32_0 : i32, i32
  }
  func.func @transform_2(%arg0: i32) -> (i32, i32) {
    %c0_i32 = arith.constant 0 : i32
    %c0_i32_0 = arith.constant 0 : i32
    return %arg0, %c0_i32 : i32, i32
  }
}

</mosaic_0001>

<llo_original>
// kernel: tpu_custom_call.1
$region0: #{tpu_custom_call.1}
  #allocation0 [shape = 'u32[]', space=smem, size = 0x4, offset = 0x4, fixed_abs, tag = 'smem constant byte address 0x4 - core index']
  #allocation1 [shape = 'u32[144,128]{1,0:T(1,128)}', space=vmem, size = 0x12000, scoped, tag = 'internal scratch']
  %s0 = inlined_call_operand.vmem [shape: s32[16,4], index: 0, kind: input, shape index: {}]
  %s1 = inlined_call_operand.hbm [shape: f32[32,64], index: 1, kind: input, shape index: {}]
  %s2 = inlined_call_operand.hbm [shape: f32[16,64], index: 2, kind: output, shape index: {}]
  %s3 = sld [smem:[#allocation0]]
  $region22: #{tpu_custom_call.1} parent=0
    _
  %s5 = ssub.s32 1, %s3
  %s6 = scalar_select 0, %s5, %s3
  $region1: #{tpu_custom_call.1} parent=0
    #allocation2 [shape = 'u8[16384]{0}', space=vmem, size = 0x4000, scoped, tag = 'input window, operand 1, single buffered']
    #allocation3 [shape = 's32[1]{0}', space=sflag, size = 0x4, scoped, tag = 'scoped memory for tpu_custom_call.1']
    #allocation4 [shape = 's32[1]{0}', space=sflag, size = 0x4, scoped, tag = 'scoped memory for tpu_custom_call.1']
    #allocation5 [shape = 'u8[8192]{0}', space=vmem, size = 0x2000, scoped, tag = 'output window, operand 0, single buffered']
    %7 = vsyncpa [#allocation3], 0
    %8 = vsyncpa [#allocation4], 0
    // Predicated region
    $region2: #{tpu_custom_call.1} parent=1 // pred_check
      _
    $region3: #{tpu_custom_call.1} parent=1 // pred_check_branch
      %10 = sbr.rel (0) target = $region5
    $region4: #{tpu_custom_call.1} parent=1 // pred_region
      _
    $region5: #{tpu_custom_call.1} parent=1 // pred_fallthru
      _
    // Predicated region
    $region6: #{tpu_custom_call.1} parent=1 // pred_check
      _
    $region7: #{tpu_custom_call.1} parent=1 // pred_check_branch
      %12 = sbr.rel (0) target = $region9
    $region8: #{tpu_custom_call.1} parent=1 // pred_region
      %s14 = ssub.s32 512, 512
      %15 = vsyncadd [#allocation3], %s14
      %s16 = sshll.u32 [#allocation2], 4
      %s17 = int_to_ptr.vmem [resolvable:$true] %s16
      %22 = dma.hbm_to_vmem [thread:$0]  %s1, 512, %s17, [#allocation3], 128, 128, 8
    $region9: #{tpu_custom_call.1} parent=1 // pred_fallthru
      _
    // Predicated region
    $region10: #{tpu_custom_call.1} parent=1 // pred_check
      _
    $region11: #{tpu_custom_call.1} parent=1 // pred_check_branch
      %24 = sbr.rel (0) target = $region13
    $region12: #{tpu_custom_call.1} parent=1 // pred_region
      %25 = dma.done [#allocation3], 512
    $region13: #{tpu_custom_call.1} parent=1 // pred_fallthru
      _
    %v26 = vld [vmem:[%s0] sm:$0xff]
    %v27 = vld [vmem:[%s0 + $0x8] sm:$0xff]
    %v28 = vlaneseq
    %v29 = vand.u32 %v28, 127
    %30 = vset.pattern.permute.xlu0 0
    %31 = vperm.xlu0 %30, %v26
    %v32 = vpop.permute.xlu0 %31
    %33 = vset.pattern.permute.xlu0 0
    %34 = vperm.xlu0 %33, %v27
    %v35 = vpop.permute.xlu0 %34
    %vm36 = vcmp.eq.s32.totalorder %v29, %v32
    %vm37 = vcmp.eq.s32.totalorder %v29, %v35
    %v38 = vsel %vm36, 1.0, 0.0
    %v39 = vsel %vm37, 1.0, 0.0
    %v40 = vadd.f32 %v38, 0.0
    %v41 = vadd.f32 %v39, 0.0
    %42 = vset.pattern.permute.xlu0 1
    %43 = vperm.xlu0 %42, %v26
    %v44 = vpop.permute.xlu0 %43
    %45 = vset.pattern.permute.xlu0 1
    %46 = vperm.xlu0 %45, %v27
    %v47 = vpop.permute.xlu0 %46
    %vm48 = vcmp.eq.s32.totalorder %v29, %v44
    %vm49 = vcmp.eq.s32.totalorder %v29, %v47
    %v50 = vsel %vm48, 1.0, 0.0
    %v51 = vsel %vm49, 1.0, 0.0
    %v52 = vadd.f32 %v40, %v50
    %v53 = vadd.f32 %v41, %v51
    %54 = vset.pattern.permute.xlu0 2
    %55 = vperm.xlu0 %54, %v26
    %v56 = vpop.permute.xlu0 %55
    %57 = vset.pattern.permute.xlu0 2
    %58 = vperm.xlu0 %57, %v27
    %v59 = vpop.permute.xlu0 %58
    %vm60 = vcmp.eq.s32.totalorder %v29, %v56
    %vm61 = vcmp.eq.s32.totalorder %v29, %v59
    %v62 = vsel %vm60, 1.0, 0.0
    %v63 = vsel %vm61, 1.0, 0.0
    %v64 = vadd.f32 %v52, %v62
    %v65 = vadd.f32 %v53, %v63
    %66 = vset.pattern.permute.xlu0 3
    %67 = vperm.xlu0 %66, %v26
    %v68 = vpop.permute.xlu0 %67
    %69 = vset.pattern.permute.xlu0 3
    %70 = vperm.xlu0 %69, %v27
    %v71 = vpop.permute.xlu0 %70
    %vm72 = vcmp.eq.s32.totalorder %v29, %v68
    %vm73 = vcmp.eq.s32.totalorder %v29, %v71
    %v74 = vsel %vm72, 1.0, 0.0
    %v75 = vsel %vm73, 1.0, 0.0
    %v76 = vadd.f32 %v64, %v74
    %v77 = vadd.f32 %v65, %v75
    %v78 = vld [vmem:[#allocation2] sm:$0xff]
    %v79 = vld [vmem:[#allocation2 + $0x8] sm:$0xff]
    %v80 = vld [vmem:[#allocation2 + $0x10] sm:$0xff]
    %v81 = vld [vmem:[#allocation2 + $0x18] sm:$0xff]
    %vm82 = vcmask 261120
    %v84 = vsel %vm82, %v76, 0
    %v87 = vsel %vm82, %v77, 0
    %89 = vmatprep.subr.mxu0 0.0
    %90 = vmatpush1.msra.mxu0 0.0
    %91 = vmatprep.subr.mxu0 0.0
    %92 = vmatpush1.msra.mxu0 0.0
    %93 = vmatprep.subr.mxu0 0.0
    %94 = vmatpush1.msra.mxu0 0.0
    %95 = vmatprep.subr.mxu0 0.0
    %96 = vmatpush1.msra.mxu0 0.0
    %97 = vmatprep.subr.mxu0 0.0
    %98 = vmatpush1.msra.mxu0 0.0
    %99 = vmatprep.subr.mxu0 0.0
    %100 = vmatpush1.msra.mxu0 0.0
    %101 = vmatprep.subr.mxu0 0.0
    %102 = vmatpush1.msra.mxu0 0.0
    %103 = vmatprep.subr.mxu0 0.0
    %104 = vmatpush1.msra.mxu0 0.0
    %105 = vmatprep.subr.mxu0 0.0
    %106 = vmatpush1.msra.mxu0 0.0
    %107 = vmatprep.subr.mxu0 0.0
    %108 = vmatpush1.msra.mxu0 0.0
    %109 = vmatprep.subr.mxu0 0.0
    %110 = vmatpush1.msra.mxu0 0.0
    %111 = vmatprep.subr.mxu0 0.0
    %112 = vmatpush1.msra.mxu0 0.0
    %113 = vmatprep.subr.mxu0 0.0
    %114 = vmatpush1.msra.mxu0 %v81
    %115 = vmatprep.subr.mxu0 0.0
    %116 = vmatpush1.msra.mxu0 %v80
    %117 = vmatprep.subr.mxu0 0.0
    %118 = vmatpush1.msra.mxu0 %v79
    %119 = vmatprep.subr.mxu0 0.0
    %120 = vmatpush1.msra.mxu0 %v78
    %121 = vmatprep.subr.mxu0 0.0
    %122 = vmatpush2.msra.mxu0 0.0
    %123 = vmatprep.subr.mxu0 0.0
    %124 = vmatpush2.msra.mxu0 0.0
    %125 = vmatprep.subr.mxu0 0.0
    %126 = vmatpush2.msra.mxu0 0.0
    %127 = vmatprep.subr.mxu0 0.0
    %128 = vmatpush2.msra.mxu0 0.0
    %129 = vmatprep.subr.mxu0 0.0
    %130 = vmatpush2.msra.mxu0 0.0
    %131 = vmatprep.subr.mxu0 0.0
    %132 = vmatpush2.msra.mxu0 0.0
    %133 = vmatprep.subr.mxu0 0.0
    %134 = vmatpush2.msra.mxu0 0.0
    %135 = vmatprep.subr.mxu0 0.0
    %136 = vmatpush2.msra.mxu0 0.0
    %137 = vmatprep.subr.mxu0 0.0
    %138 = vmatpush2.msra.mxu0 0.0
    %139 = vmatprep.subr.mxu0 0.0
    %140 = vmatpush2.msra.mxu0 0.0
    %141 = vmatprep.subr.mxu0 0.0
    %142 = vmatpush2.msra.mxu0 0.0
    %143 = vmatprep.subr.mxu0 0.0
    %144 = vmatpush2.msra.mxu0 0.0
    %145 = vmatprep.subr.mxu0 0.0
    %146 = vmatpush2.msra.mxu0 0.0
    %147 = vmatprep.subr.mxu0 0.0
    %148 = vmatpush2.msra.mxu0 0.0
    %149 = vmatprep.subr.mxu0 0.0
    %150 = vmatpush2.msra.mxu0 0.0
    %151 = vmatprep.subr.mxu0 0.0
    %152 = vmatpush2.msra.mxu0 0.0
    %153 = vmatprep.mubr.f32.mxu0 0.0
    %154 = vmatmul.mubr.f32.gmra.mxu0 %v84
    %v155 = vpop.f32.mrf.mxu0
    %v156 = vadd.f32 0.0, %v155
    %v157 = vpop.f32.mrf.mxu0
    %158 = vmatprep.mubr.f32.mxu0 0.0
    %159 = vmatmul.mubr.f32.gmra.mxu0 %v87
    %v160 = vpop.f32.mrf.mxu0
    %v161 = vadd.f32 0.0, %v160
    %v162 = vpop.f32.mrf.mxu0
    %163 = vdwg.mxu0
    %vm164 = vcmask 523264
    %165 = vst.msk [vmem:[#allocation5] sm:$0xff] %vm164, %v156
    %166 = vst.msk [vmem:[#allocation5 + $0x8] sm:$0xff] %vm164, %v161
    // Predicated region
    $region14: #{tpu_custom_call.1} parent=1 // pred_check
      _
    $region15: #{tpu_custom_call.1} parent=1 // pred_check_branch
      %168 = sbr.rel (0) target = $region17
    $region16: #{tpu_custom_call.1} parent=1 // pred_region
      %s170 = ssub.s32 256, 256
      %171 = vsyncadd [#allocation4], %s170
      %s172 = sshll.u32 [#allocation5], 4
      %s173 = int_to_ptr.vmem [resolvable:$true] %s172
      %178 = dma.vmem_to_hbm [thread:$0]  %s173, 256, %s2, [#allocation4], 128, 128, 8
    $region17: #{tpu_custom_call.1} parent=1 // pred_fallthru
      _
    // Predicated region
    $region18: #{tpu_custom_call.1} parent=1 // pred_check
      _
    $region19: #{tpu_custom_call.1} parent=1 // pred_check_branch
      %180 = sbr.rel (0) target = $region21
    $region20: #{tpu_custom_call.1} parent=1 // pred_region
      %181 = dma.done [#allocation4], 256
    $region21: #{tpu_custom_call.1} parent=1 // pred_fallthru
      _
    %182 = vsyncpa [#allocation3], 1
    %183 = vsyncpa [#allocation4], 1

</llo_original>
